<compile_context>
chip_gen: v5e
topology: v5e:2x2
jax: 0.10.0
libtpu: 0.0.40
codegen_flags: <defaults>
</compile_context>

<pallas_src>
import functools

import jax
import jax.numpy as jnp
from jax.experimental import pallas as pl
from jax.experimental.pallas import tpu as pltpu


def _focus_gemm_kernel(w_ref, at_ref, shift_ref, o_ref):
    """Fused 1x1 conv (as transposed GEMM) + BN(eval) shift + SiLU.

    w_ref:     (C2, K)      bf16, BN-scale-folded, K-permuted conv weight
    at_ref:    (1, K, TN)   bf16 activations, pixels on the lane axis
    shift_ref: (C2, 1)      f32, beta - mean * scale
    o_ref:     (1, C2, TN)  output tile (lane-dense along TN)
    """
    acc = jnp.dot(w_ref[...], at_ref[0], preferred_element_type=jnp.float32)
    y = acc + shift_ref[...]
    # SiLU: y * sigmoid(y).  exp and the approximate reciprocal both run on the
    # EUP slot, overlapping MXU/DMA; no VPU divide.
    s = pl.reciprocal(1.0 + jnp.exp(-y), approx=True)
    o_ref[0] = (y * s).astype(o_ref.dtype)


def _pick_pixel_tile(mh, batch, per_pixel_bytes, vmem_budget_bytes, tn_cap=32768):
    """Pick the pixel-tile (lane-axis) size.

    - Largest lane-aligned tile that fits the per-step VMEM budget (counting
      double-buffered in/out blocks and f32 epilogue temporaries) so per-grid
      step fixed overhead (~0.35us) is amortized.
    - When B == 1, force >=2 (ideally 4) tiles so both v7x TensorCores get
      work under the "parallel" grid semantics.
    - The last tile may be ragged (Pallas masks the boundary) -> no host-side
      pad / slice passes over the activations or output.
    """
    tn = max(128, min(tn_cap, vmem_budget_bytes // per_pixel_bytes))
    tn = (tn // 128) * 128

    min_tiles = 1
    if batch == 1:
        if mh >= 4 * 128:
            min_tiles = 4
        elif mh >= 2 * 128:
            min_tiles = 2

    if mh <= tn and min_tiles == 1:
        return mh                      # single full-extent tile (always legal)

    tn = min(tn, -(-mh // min_tiles))  # ceil-div split for the B==1 case
    tn = max(128, (tn // 128) * 128)
    return tn


@functools.partial(jax.jit, static_argnames=("out_dtype", "vmem_budget_bytes"))
def focus_forward(x, conv_w, bn_gamma, bn_beta, bn_mean, bn_var, *,
                  out_dtype=jnp.float32, vmem_budget_bytes=16 * 2**20):
    """Focus forward pass.

    Args:
      x:       (B, C1, H, W) float32, NCHW (H, W even)
      conv_w:  (C2, 4*C1, 1, 1) Conv2d weight (bias=False)
      bn_*:    (C2,) BatchNorm2d params / running stats (eval mode)
      out_dtype: output dtype; keep float32 to match the PyTorch module, pass
                 jnp.bfloat16 if the downstream consumer tolerates it (halves
                 the dominant HBM write for realistic C2).
    Returns:
      (B, C2, H//2, W//2) in `out_dtype`, NCHW
    """
    B, C1, H, W = x.shape
    C2 = conv_w.shape[0]
    eps = 1e-5
    H2, W2 = H // 2, W // 2
    K = 4 * C1
    Mh = H2 * W2

    # --- space-to-depth -> A^T = (B, K, Mh) in bf16 --------------------------
    # Our K ordering: k = c*4 + hp*2 + wp   (hp/wp = row/col parity).
    # Expressed as one convert+reshape+transpose; allow_input_fusion below lets
    # XLA fuse it into the Pallas input DMA instead of materializing it in HBM.
    x6 = x.astype(jnp.bfloat16).reshape(B, C1, H2, 2, W2, 2)
    at = jnp.transpose(x6, (0, 1, 3, 5, 2, 4)).reshape(B, K, Mh)

    # --- permute the (tiny) weight to match our K order, fold BN scale -------
    # PyTorch cat order: k_torch = (2*wp + hp)*C1 + c
    w = conv_w.reshape(C2, 2, 2, C1)                    # (co, wp, hp, c)
    w = jnp.transpose(w, (0, 3, 2, 1)).reshape(C2, K)   # (co, c*4 + hp*2 + wp)
    w = w.astype(jnp.float32)
    scale = bn_gamma / jnp.sqrt(bn_var + eps)
    w_scaled = (w * scale[:, None]).astype(jnp.bfloat16)           # (C2, K)
    shift = (bn_beta - bn_mean * scale).reshape(C2, 1).astype(jnp.float32)

    # --- pixel tile = lane axis of the output --------------------------------
    out_itemsize = jnp.dtype(out_dtype).itemsize
    per_pixel_bytes = (2 * K * 2            # double-buffered bf16 input block
                       + 2 * C2 * out_itemsize   # double-buffered output block
                       + 3 * C2 * 4)        # f32 epilogue temporaries
    tn = _pick_pixel_tile(Mh, B, per_pixel_bytes, vmem_budget_bytes)

    grid = (B, pl.cdiv(Mh, tn))
    out = pl.pallas_call(
        _focus_gemm_kernel,
        out_shape=jax.ShapeDtypeStruct((B, C2, Mh), out_dtype),
        grid_spec=pltpu.PrefetchScalarGridSpec(
            num_scalar_prefetch=0,
            grid=grid,
            in_specs=[
                pl.BlockSpec((C2, K), lambda b, j: (0, 0)),
                pl.BlockSpec((1, K, tn), lambda b, j: (b, 0, j)),
                pl.BlockSpec((C2, 1), lambda b, j: (0, 0)),
            ],
            out_specs=pl.BlockSpec((1, C2, tn), lambda b, j: (b, 0, j)),
        ),
        compiler_params=pltpu.CompilerParams(
            dimension_semantics=("parallel", "parallel"),
            # Allow XLA to fuse the space-to-depth producer of `at` (input 1)
            # into the kernel's input DMA.
            allow_input_fusion=[False, True, False],
            vmem_limit_bytes=32 * 2**20,
        ),
    )(w_scaled, at, shift)

    # (B, C2, H2*W2) is already NCHW-flattened: just reshape, no transpose.
    return out.reshape(B, C2, H2, W2)


def _reference(x, conv_w, bn_gamma, bn_beta, bn_mean, bn_var):
    """Pure-JAX f32 reference for the same Focus forward (eval-mode BN)."""
    eps = 1e-5
    s0 = x[:, :, ::2, ::2]
    s1 = x[:, :, 1::2, ::2]
    s2 = x[:, :, ::2, 1::2]
    s3 = x[:, :, 1::2, 1::2]
    xc = jnp.concatenate([s0, s1, s2, s3], axis=1)
    y = jnp.einsum("bkhw,ok->bohw", xc, conv_w.reshape(conv_w.shape[0], -1))
    scale = bn_gamma / jnp.sqrt(bn_var + eps)
    y = y * scale[None, :, None, None] + (bn_beta - bn_mean * scale)[None, :, None, None]
    return y * jax.nn.sigmoid(y)


def _make_inputs(key, B, C1, H, W, C2):
    k_x, k_w, k_g, k_b, k_m, k_v = jax.random.split(key, 6)
    x = jax.random.normal(k_x, (B, C1, H, W), dtype=jnp.float32)
    conv_w = jax.random.normal(k_w, (C2, 4 * C1, 1, 1), dtype=jnp.float32) * 0.1
    bn_gamma = 1.0 + 0.1 * jax.random.normal(k_g, (C2,), dtype=jnp.float32)
    bn_beta = 0.1 * jax.random.normal(k_b, (C2,), dtype=jnp.float32)
    bn_mean = 0.1 * jax.random.normal(k_m, (C2,), dtype=jnp.float32)
    bn_var = 1.0 + 0.1 * jax.random.uniform(k_v, (C2,), dtype=jnp.float32)
    return x, conv_w, bn_gamma, bn_beta, bn_mean, bn_var


def _check(out, ref, tol):
    err = float(jnp.max(jnp.abs(out.astype(jnp.float32) - ref)))
    assert err < tol, f"max abs error {err} >= {tol}"


if __name__ == "__main__":
    key = jax.random.PRNGKey(0)
    k1, k2, k3 = jax.random.split(key, 3)

    # bf16 GEMM feed + approx-reciprocal sigmoid -> compare to the f32
    # reference with a correspondingly relaxed absolute tolerance.
    TOL = 5e-2

    # 1) Module-default small config: Focus(c1=4, c2=8), H=W=16.
    args = _make_inputs(k1, B=2, C1=4, H=16, W=16, C2=8)
    out = jax.block_until_ready(focus_forward(*args))
    assert out.shape == (2, 8, 8, 8), out.shape
    _check(out, _reference(*args), TOL)

    # 2) Larger shape: full-extent pixel tile per batch image, grid=(2, 1).
    args = _make_inputs(k2, B=2, C1=4, H=128, W=128, C2=8)
    out = jax.block_until_ready(focus_forward(*args))
    assert out.shape == (2, 8, 64, 64), out.shape
    _check(out, _reference(*args), TOL)

    # 3) B=1 (forced pixel-axis split for v7x megacore), K=12 (not a multiple
    #    of 8) and a ragged last pixel tile (Mh=450, tn=128) -> exercises the
    #    no-pad / masked-boundary path.
    args = _make_inputs(k3, B=1, C1=3, H=30, W=60, C2=16)
    out = jax.block_until_ready(focus_forward(*args))
    assert out.shape == (1, 16, 15, 30), out.shape
    _check(out, _reference(*args), TOL)

    print("KERNEL_OK")
</pallas_src>

<mosaic_0001>
module attributes {stable_mosaic.version = 11 : i64} {
  func.func @_focus_gemm_kernel(%arg0: i32, %arg1: i32, %arg2: memref<8x16xbf16, #tpu.memory_space<vmem>>, %arg3: memref<1x16x64xbf16, #tpu.memory_space<vmem>>, %arg4: memref<8x1xf32, #tpu.memory_space<vmem>>, %arg5: memref<1x8x64xf32, #tpu.memory_space<vmem>>) attributes {dimension_semantics = [#tpu.dimension_semantics<parallel>, #tpu.dimension_semantics<parallel>], iteration_bounds = array<i64: 2, 1>, scalar_prefetch = 0 : i64, scratch_operands = 0 : i64, tpu.core_type = #tpu.core_type<tc>, window_params = [{pipeline_mode = #tpu.pipeline_mode<synchronous>, transform_indices = @transform_0, window_bounds = array<i64: 8, 16>}, {transform_indices = @transform_1, window_bounds = array<i64: 1, 16, 64>}, {pipeline_mode = #tpu.pipeline_mode<synchronous>, transform_indices = @transform_2, window_bounds = array<i64: 8, 1>}, {transform_indices = @transform_3, window_bounds = array<i64: 1, 8, 64>}]} {
    %c0 = arith.constant 0 : index
    %c0_0 = arith.constant 0 : index
    %0 = vector.load %arg2[%c0, %c0_0] : memref<8x16xbf16, #tpu.memory_space<vmem>>, vector<8x16xbf16>
    %c0_1 = arith.constant 0 : index
    %c0_2 = arith.constant 0 : index
    %c0_3 = arith.constant 0 : index
    %1 = vector.load %arg3[%c0_1, %c0_2, %c0_3] : memref<1x16x64xbf16, #tpu.memory_space<vmem>>, vector<1x16x64xbf16>
    %2 = vector.shape_cast %1 : vector<1x16x64xbf16> to vector<16x64xbf16>
    %cst = arith.constant dense<0.000000e+00> : vector<8x64xf32>
    %3 = tpu.matmul %0, %2, %cst {dimension_numbers = #tpu.dot_dimension_numbers<[1], [0], [0], [1], [0, 0, 1, 1], [], []>} : vector<8x16xbf16>, vector<16x64xbf16>, vector<8x64xf32> -> vector<8x64xf32>
    %c0_4 = arith.constant 0 : index
    %c0_5 = arith.constant 0 : index
    %4 = vector.load %arg4[%c0_4, %c0_5] : memref<8x1xf32, #tpu.memory_space<vmem>>, vector<8x1xf32>
    %5 = vector.broadcast %4 : vector<8x1xf32> to vector<8x64xf32>
    %6 = arith.addf %3, %5 : vector<8x64xf32>
    %cst_6 = arith.constant 0.000000e+00 : f32
    %7 = vector.broadcast %cst_6 : f32 to vector<8x64xf32>
    %8 = arith.subf %7, %6 : vector<8x64xf32>
    %9 = math.exp %8 : vector<8x64xf32>
    %cst_7 = arith.constant 1.000000e+00 : f32
    %10 = vector.broadcast %cst_7 : f32 to vector<8x64xf32>
    %11 = arith.addf %10, %9 : vector<8x64xf32>
    %12 = tpu.reciprocal %11 {approx = true} : vector<8x64xf32> -> vector<8x64xf32>
    %13 = arith.mulf %6, %12 : vector<8x64xf32>
    %c0_8 = arith.constant 0 : index
    %c0_9 = arith.constant 0 : index
    %c0_10 = arith.constant 0 : index
    %14 = vector.load %arg5[%c0_8, %c0_9, %c0_10] : memref<1x8x64xf32, #tpu.memory_space<vmem>>, vector<1x8x64xf32>
    %15 = vector.shape_cast %14 : vector<1x8x64xf32> to vector<8x64xf32>
    %16 = vector.shape_cast %13 : vector<8x64xf32> to vector<1x8x64xf32>
    tpu.vector_store %arg5[%c0_8, %c0_9, %c0_10], %16 {strides = array<i32>} : memref<1x8x64xf32, #tpu.memory_space<vmem>>, vector<1x8x64xf32>,
    return
  }
  func.func @transform_0(%arg0: i32, %arg1: i32) -> (i32, i32) {
    %c0_i32 = arith.constant 0 : i32
    %c0_i32_0 = arith.constant 0 : i32
    %c0_i32_1 = arith.constant 0 : i32
    return %c0_i32, %c0_i32_0 : i32, i32
  }
  func.func @transform_1(%arg0: i32, %arg1: i32) -> (i32, i32, i32) {
    %c0_i32 = arith.constant 0 : i32
    %c0_i32_0 = arith.constant 0 : i32
    return %arg0, %c0_i32, %arg1 : i32, i32, i32
  }
  func.func @transform_2(%arg0: i32, %arg1: i32) -> (i32, i32) {
    %c0_i32 = arith.constant 0 : i32
    %c0_i32_0 = arith.constant 0 : i32
    %c0_i32_1 = arith.constant 0 : i32
    return %c0_i32, %c0_i32_0 : i32, i32
  }
  func.func @transform_3(%arg0: i32, %arg1: i32) -> (i32, i32, i32) {
    %c0_i32 = arith.constant 0 : i32
    %c0_i32_0 = arith.constant 0 : i32
    return %arg0, %c0_i32, %arg1 : i32, i32, i32
  }
}

</mosaic_0001>

<llo_original>
// kernel: focus_forward.1
$region0: #{focus_forward.1}
  #allocation0 [shape = 'u32[]', space=smem, size = 0x4, offset = 0x4, fixed_abs, tag = 'smem constant byte address 0x4 - core index']
  #allocation1 [shape = 'u32[72,128]{1,0:T(1,128)}', space=vmem, size = 0x9000, scoped, tag = 'internal scratch']
  %s0 = inlined_call_operand.vmem [shape: bf16[8,16], index: 0, kind: input, shape index: {}]
  %s1 = inlined_call_operand.vmem [shape: bf16[2,16,64], index: 1, kind: input, shape index: {}]
  %s2 = inlined_call_operand.vmem [shape: f32[8,1], index: 2, kind: input, shape index: {}]
  %s3 = inlined_call_operand.vmem [shape: f32[2,8,64], index: 3, kind: output, shape index: {}]
  %s4 = sld [smem:[#allocation0]]
  $region45: #{focus_forward.1} parent=0
    _
  %s6 = ssub.s32 1, %s4
  %s7 = scalar_select 0, %s6, %s4
  loop: start=0, step=1, limit=4
  $region2: #{focus_forward.1} parent=0 // loop_pre_header
    _
  $region3: #{focus_forward.1} parent=0 // loop_header
    %s9 = sphi 0, %s13
    %p10 = scmp.ge.s32.totalorder %s9, 4
    %s16 = sphi 0, %s28
    %s17 = sphi 0, %s24
    %s18 = sphi 0, %s16
    %s19 = sphi 0, %s17
    %s20 = sphi 0, %s18
    %s21 = sphi 0, %s19
    %s29 = sphi 0, %s29
    %s31 = sphi 0, %s29
    %s32 = sphi 0, %s31
    %s46 = sphi 0, %s32
    %s54 = sphi 0, %s56
    %s57 = sphi 0, %s54
    %s58 = sphi 0, %s57
    %s74 = sphi 0, %s58
    %s78 = sphi 0, %s78
    %s80 = sphi 0, %s78
    %s81 = sphi 0, %s80
    %s95 = sphi 0, %s81
    %s103 = sphi 0, %s105
    %s106 = sphi 0, %s103
    %s107 = sphi 0, %s106
    %s123 = sphi 0, %s107
  $region4: #{focus_forward.1} parent=0 // loop_header_branch
    %12 = sbr.rel (%p10) target = $region8
  $region5: #{focus_forward.1} parent=0 // loop_body
    %s14 = ssub.s32 %s9, 1
    %s15 = ssub.s32 %s9, 2
    %s22 = sadd.s32 1, %s17
    %p23 = scmp.ge.s32.totalorder %s22, 1
    %s24 = scalar_select %p23, 0, %s22
    %s25 = sadd.s32 1, %s16
    %s26 = scalar_select %p23, %s25, %s16
    %p27 = scmp.ge.s32.totalorder %s26, 2
    %s28 = scalar_select %p27, 0, %s26
    %s30 = sadd.s32 %s29, 1
    %p33 = scmp.eq.s32.totalorder %s9, 1
    %p34 = scmp.ne.s32.totalorder %s29, %s31
    %p35 = scmp.eq.s32.totalorder %s9, 0
    %p36 = por %p34, %p35
    %p37 = scmp.ne.s32.totalorder %s29, %s31
    %p38 = scmp.eq.s32.totalorder %s14, 1
    %p39 = por %p37, %p38
    %p40 = scmp.ne.s32.totalorder %s31, %s32
    %p41 = scmp.eq.s32.totalorder %s14, 0
    %p42 = por %p40, %p41
    %p43 = scmp.ne.s32.totalorder %s31, %s32
    %p44 = scmp.eq.s32.totalorder %s15, 1
    %p45 = por %p43, %p44
    %p47 = scmp.ne.s32.totalorder %s32, %s46
    %p48 = scmp.eq.s32.totalorder %s15, 0
    %p49 = por %p47, %p48
    %s50 = ssub.s32 %s16, %s28
    %s51 = ssub.s32 %s17, %s24
    %s52 = sor.u32 %s50, %s51
    %p53 = scmp.eq.s32.totalorder %s52, 0
    %s55 = sadd.s32 %s54, 1
    %s56 = scalar_select %p53, %s54, %s55
    %p59 = pneg %p53
    %p60 = scmp.eq.s32.totalorder %s9, 1
    %p61 = por %p59, %p60
    %p62 = scmp.ne.s32.totalorder %s54, %s57
    %p63 = scmp.eq.s32.totalorder %s9, 0
    %p64 = por %p62, %p63
    %p65 = scmp.ne.s32.totalorder %s54, %s57
    %p66 = scmp.eq.s32.totalorder %s14, 1
    %p67 = por %p65, %p66
    %p68 = scmp.ne.s32.totalorder %s57, %s58
    %p69 = scmp.eq.s32.totalorder %s14, 0
    %p70 = por %p68, %p69
    %p71 = scmp.ne.s32.totalorder %s57, %s58
    %p72 = scmp.eq.s32.totalorder %s15, 1
    %p73 = por %p71, %p72
    %p75 = scmp.ne.s32.totalorder %s58, %s74
    %p76 = scmp.eq.s32.totalorder %s15, 0
    %p77 = por %p75, %p76
    %s79 = sadd.s32 %s78, 1
    %p82 = scmp.eq.s32.totalorder %s9, 1
    %p83 = scmp.ne.s32.totalorder %s78, %s80
    %p84 = scmp.eq.s32.totalorder %s9, 0
    %p85 = por %p83, %p84
    %p86 = scmp.ne.s32.totalorder %s78, %s80
    %p87 = scmp.eq.s32.totalorder %s14, 1
    %p88 = por %p86, %p87
    %p89 = scmp.ne.s32.totalorder %s80, %s81
    %p90 = scmp.eq.s32.totalorder %s14, 0
    %p91 = por %p89, %p90
    %p92 = scmp.ne.s32.totalorder %s80, %s81
    %p93 = scmp.eq.s32.totalorder %s15, 1
    %p94 = por %p92, %p93
    %p96 = scmp.ne.s32.totalorder %s81, %s95
    %p97 = scmp.eq.s32.totalorder %s15, 0
    %p98 = por %p96, %p97
    %s99 = ssub.s32 %s16, %s28
    %s100 = ssub.s32 %s17, %s24
    %s101 = sor.u32 %s99, %s100
    %p102 = scmp.eq.s32.totalorder %s101, 0
    %s104 = sadd.s32 %s103, 1
    %s105 = scalar_select %p102, %s103, %s104
    %p108 = pneg %p102
    %p109 = scmp.eq.s32.totalorder %s9, 1
    %p110 = por %p108, %p109
    %p111 = scmp.ne.s32.totalorder %s103, %s106
    %p112 = scmp.eq.s32.totalorder %s9, 0
    %p113 = por %p111, %p112
    %p114 = scmp.ne.s32.totalorder %s103, %s106
    %p115 = scmp.eq.s32.totalorder %s14, 1
    %p116 = por %p114, %p115
    %p117 = scmp.ne.s32.totalorder %s106, %s107
    %p118 = scmp.eq.s32.totalorder %s14, 0
    %p119 = por %p117, %p118
    %p120 = scmp.ne.s32.totalorder %s106, %s107
    %p121 = scmp.eq.s32.totalorder %s15, 1
    %p122 = por %p120, %p121
    %p124 = scmp.ne.s32.totalorder %s107, %s123
    %p125 = scmp.eq.s32.totalorder %s15, 0
    %p126 = por %p124, %p125
    %p127 = scmp.le.s32.totalorder 1, %s9
    %p128 = scmp.lt.s32.totalorder %s9, 3
    %p129 = pnand %p127, %p128
    %p130 = pneg %p129
    // Predicated region
    $region9: #{focus_forward.1} parent=5 // pred_check
      _
    $region10: #{focus_forward.1} parent=5 // pred_check_branch
      %132 = sbr.rel (%p129) target = $region12
    $region11: #{focus_forward.1} parent=5 // pred_region
      %s133 = ssub.s32 %s9, 1
      // Predicated region
      $region13: #{focus_forward.1} parent=11 // pred_check
        %p134 = pneg %p42
      $region14: #{focus_forward.1} parent=11 // pred_check_branch
        %136 = sbr.rel (%p134) target = $region16
      $region15: #{focus_forward.1} parent=11 // pred_region
        _
      $region16: #{focus_forward.1} parent=11 // pred_fallthru
        _
      // Predicated region
      $region17: #{focus_forward.1} parent=11 // pred_check
        %p137 = pneg %p91
      $region18: #{focus_forward.1} parent=11 // pred_check_branch
        %139 = sbr.rel (%p137) target = $region20
      $region19: #{focus_forward.1} parent=11 // pred_region
        _
      $region20: #{focus_forward.1} parent=11 // pred_fallthru
        _
    $region12: #{focus_forward.1} parent=5 // pred_fallthru
      _
    %p140 = scmp.lt.s32.totalorder %s9, 2
    // Predicated region
    $region21: #{focus_forward.1} parent=5 // pred_check
      %p141 = pneg %p140
    $region22: #{focus_forward.1} parent=5 // pred_check_branch
      %143 = sbr.rel (%p141) target = $region24
    $region23: #{focus_forward.1} parent=5 // pred_region
      // Predicated region
      $region25: #{focus_forward.1} parent=23 // pred_check
        %p144 = pneg %p64
      $region26: #{focus_forward.1} parent=23 // pred_check_branch
        %146 = sbr.rel (%p144) target = $region28
      $region27: #{focus_forward.1} parent=23 // pred_region
        %p147 = scmp.lt.s32.totalorder %s16, 1
        %s148 = scalar_select %p147, %s16, 1
        %p149 = scmp.lt.s32.totalorder %s17, 0
        %s150 = scalar_select %p149, %s17, 0
        %s151 = smul.addr %s148, 2
        %s152 = sadd.s32 %s150, %s151
        %s153 = smul.addr %s152, 4
        %s154 = scalar_lea.vmem %s1, %s153
      $region28: #{focus_forward.1} parent=23 // pred_fallthru
        _
    $region24: #{focus_forward.1} parent=5 // pred_fallthru
      _
    %p155 = scmp.le.s32.totalorder 1, %s9
    %p156 = scmp.lt.s32.totalorder %s9, 3
    %p157 = pnand %p155, %p156
    %p158 = pneg %p157
    // Predicated region
    $region29: #{focus_forward.1} parent=5 // pred_check
      _
    $region30: #{focus_forward.1} parent=5 // pred_check_branch
      %160 = sbr.rel (%p157) target = $region32
    $region31: #{focus_forward.1} parent=5 // pred_region
      %s161 = ssub.s32 %s9, 1
      %p162 = pneg %p42
      %p163 = pneg %p39
      %p164 = scmp.lt.s32.totalorder %s18, 1
      %s165 = scalar_select %p164, %s18, 1
      %p166 = scmp.lt.s32.totalorder %s19, 0
      %s167 = scalar_select %p166, %s19, 0
      %s168 = smul.addr %s165, 2
      %s169 = sadd.s32 %s167, %s168
      %s170 = smul.addr %s169, 4
      %s171 = scalar_lea.vmem %s1, %s170
      %p172 = pneg %p70
      %p173 = pneg %p67
      %p174 = pneg %p91
      %p175 = pneg %p88
      %p176 = pneg %p119
      %p177 = pneg %p116
      %p178 = scmp.lt.s32.totalorder %s18, 1
      %s179 = scalar_select %p178, %s18, 1
      %p180 = scmp.lt.s32.totalorder %s19, 0
      %s181 = scalar_select %p180, %s19, 0
      %s182 = sadd.s32 %s181, %s179
      %s183 = smul.addr %s182, 8
      %s184 = scalar_lea.vmem %s3, %s183
      %p185 = scmp.lt.s32.totalorder %s18, 1
      %s186 = scalar_select %p185, %s18, 1
      %p187 = scmp.lt.s32.totalorder %s19, 0
      %s188 = scalar_select %p187, %s19, 0
      %s189 = smul.addr %s186, 2
      %s190 = sadd.s32 %s188, %s189
      %s191 = smul.addr %s190, 4
      %s192 = scalar_lea.vmem %s1, %s191
      %p193 = scmp.lt.s32.totalorder %s18, 1
      %s194 = scalar_select %p193, %s18, 1
      %p195 = scmp.lt.s32.totalorder %s19, 0
      %s196 = scalar_select %p195, %s19, 0
      %s197 = sadd.s32 %s196, %s194
      %s198 = smul.addr %s197, 8
      %s199 = scalar_lea.vmem %s3, %s198
      %v201 = vld [vmem:[%s0] sm:$0xf]
      %v202 = vld [vmem:[%s192] sm:$0xf]
      %v203 = vld [vmem:[%s192 + $0x4] sm:$0xf]
      %v204 = vld [vmem:[%s2] sm:$0xff]
      %206 = vset.pattern.permute.xlu0 0
      %207 = vperm.xlu0 %206, %v204
      %v208 = vpop.permute.xlu0 %207
      %v212 = vunpack.c.l.b16 %v202
      %v213 = vunpack.c.l.b16 %v203
      %v214 = vpack.c.b16 %v213, %v212
      %vm216 = vcmask 130048
      %v218 = vsel %vm216, %v201, 0
      %220 = vmatpush.bf16.msra.mxu0 0
      %221 = vmatpush.bf16.msra.mxu0 0
      %222 = vmatpush.bf16.msra.mxu0 0
      %223 = vmatpush.bf16.msra.mxu0 0
      %224 = vmatpush.bf16.msra.mxu0 0
      %225 = vmatpush.bf16.msra.mxu0 0
      %226 = vmatpush.bf16.msra.mxu0 0
      %227 = vmatpush.bf16.msra.mxu0 %v214
      %228 = vmatmul.bf16.gmra.mxu0 %v218
      %v229 = vpop.f32.mrf.mxu0
      %v230 = vadd.f32 %v208, %v229
      %v231 = vpop.f32.mrf.mxu0
      %232 = vdwg.mxu0
      %v233 = vsub.f32 0.0, %v230
      %v234 = vmul.f32 %v233, 1.442695
      %v235 = vpow.pop %v234
      %v236 = vadd.f32 %v235, 1.0
      %v237 = vrcp.pop %v236
      %v238 = vmul.f32 %v230, %v237
      %vm239 = vcmask 523264
      %240 = vst.msk [vmem:[%s199] sm:$0xff] %vm239, %v238
      %p241 = scmp.lt.s32.totalorder %s18, 1
      %s242 = scalar_select %p241, %s18, 1
      %p243 = scmp.lt.s32.totalorder %s19, 0
      %s244 = scalar_select %p243, %s19, 0
      %s245 = sadd.s32 %s244, %s242
      %s246 = smul.addr %s245, 8
      %s247 = scalar_lea.vmem %s3, %s246
      // Predicated region
      $region33: #{focus_forward.1} parent=31 // pred_check
        %p248 = pneg %p116
      $region34: #{focus_forward.1} parent=31 // pred_check_branch
        %250 = sbr.rel (%p248) target = $region36
      $region35: #{focus_forward.1} parent=31 // pred_region
        _
      $region36: #{focus_forward.1} parent=31 // pred_fallthru
        _
    $region32: #{focus_forward.1} parent=5 // pred_fallthru
      _
    %p251 = scmp.le.s32.totalorder 2, %s9
    // Predicated region
    $region37: #{focus_forward.1} parent=5 // pred_check
      %p252 = pneg %p251
    $region38: #{focus_forward.1} parent=5 // pred_check_branch
      %254 = sbr.rel (%p252) target = $region40
    $region39: #{focus_forward.1} parent=5 // pred_region
      %s255 = ssub.s32 %s9, 2
      // Predicated region
      $region41: #{focus_forward.1} parent=39 // pred_check
        %p256 = pneg %p122
      $region42: #{focus_forward.1} parent=39 // pred_check_branch
        %258 = sbr.rel (%p256) target = $region44
      $region43: #{focus_forward.1} parent=39 // pred_region
        %p259 = scmp.lt.s32.totalorder %s20, 1
        %s260 = scalar_select %p259, %s20, 1
        %p261 = scmp.lt.s32.totalorder %s21, 0
        %s262 = scalar_select %p261, %s21, 0
        %s263 = sadd.s32 %s262, %s260
        %s264 = smul.addr %s263, 8
        %s265 = scalar_lea.vmem %s3, %s264
      $region44: #{focus_forward.1} parent=39 // pred_fallthru
        _
    $region40: #{focus_forward.1} parent=5 // pred_fallthru
      _
  $region6: #{focus_forward.1} parent=0 // loop_footer
    %s13 = sadd.s32 1, %s9
  $region7: #{focus_forward.1} parent=0 // loop_footer_branch
    %8 = sbr.rel target = $region3
  $region8: #{focus_forward.1} parent=0 // loop_exit
    _

</llo_original>
